<compile_context>
chip_gen: v5e
topology: v5e:2x2
jax: 0.10.0
libtpu: 0.0.40
codegen_flags: <defaults>
</compile_context>

<pallas_src>
import functools
import math

import jax
import jax.numpy as jnp
from jax import lax
from jax.experimental import pallas as pl
from jax.experimental.pallas import tpu as pltpu

_LANES = 128
_CHUNK = 256  # rows per in-kernel compute chunk (256*128*4B = 128 KiB f32)


def _round_up(x, m):
    return ((x + m - 1) // m) * m


def _lambda_loss_kernel(enc_ref, lam_ref, out_ref, *, rows, tm, chunk,
                        inv_b, delta, coef):
    """One grid step: accumulate the fused partial sum into the resident block.

    enc_ref, lam_ref : VMEM (tm, 128) tiles of the flattened inputs
    out_ref          : VMEM (1, 8, 128) resident f32 accumulator (per slice):
                       sum of lam*(inv_b*|enc| + delta) - coef*log(lam)
    rows             : number of valid rows in the whole (rows, 128) input
    """
    p = pl.program_id(0)
    j = pl.program_id(1)
    steps = pl.num_programs(1)
    # Nominal start row of this block (the index_map clamps the DMA, but the
    # mask below is based on this nominal position, so clamped duplicates and
    # ragged tails contribute exactly zero).
    row0 = (p * steps + j) * tm

    @pl.when(j == 0)
    def _init():
        out_ref[...] = jnp.zeros_like(out_ref)

    n_chunks = tm // chunk

    def block_sum(masked):
        def chunk_term(off):
            enc = enc_ref[pl.ds(off, chunk), :].astype(jnp.float32)
            lam = lam_ref[pl.ds(off, chunk), :].astype(jnp.float32)
            if masked:
                # Row-validity mask.  Replace BEFORE the log / abs so garbage
                # in the undefined OOB region can't produce NaN / -inf.
                limit = rows - (row0 + off)
                rid = lax.broadcasted_iota(jnp.int32, (chunk, _LANES), 0)
                valid = rid < limit
                enc = jnp.where(valid, enc, 0.0)
                lam_a = jnp.where(valid, lam, 0.0)   # masked rows -> 0 contribution
                lam_l = jnp.where(valid, lam, 1.0)   # log(1) = 0
            else:
                lam_a = lam
                lam_l = lam
            # lam > 0 (its log is taken), so |lam*enc| == lam*|enc|.
            contrib = lam_a * (inv_b * jnp.abs(enc) + delta) - coef * jnp.log(lam_l)
            # Reduce only over sublane-group axis (pure VPU adds, no XLU).
            return jnp.sum(contrib.reshape(-1, 8, _LANES), axis=0)

        if n_chunks == 1:
            return chunk_term(0)
        return lax.fori_loop(
            0, n_chunks,
            lambda c, a: a + chunk_term(pl.multiple_of(c * chunk, chunk)),
            jnp.zeros((8, _LANES), jnp.float32))

    full = (row0 + tm) <= rows     # block entirely in bounds -> skip masking
    ragged = (row0 + tm) > rows

    @pl.when(full)
    def _full():
        out_ref[0] += block_sum(masked=False)

    @pl.when(ragged)
    def _ragged():
        out_ref[0] += block_sum(masked=True)


def lambda_loss_2d(enc_hat, lam, hyp, *, block_rows=8192, n_parallel=2):
    """JAX/Pallas equivalent of LambdaLoss2D.forward((enc_hat, lam), hyp)."""
    delta = float(hyp["delta"])
    lam_init = float(hyp["lam"])
    _ = hyp["num_conv"]  # retrieved but unused, as in the PyTorch module

    # TODO(synk): a broadcastable lam (e.g. per-channel) would change the
    # sum(lam)/sum(log lam) terms; this implementation requires equal shapes.
    assert lam.shape == enc_hat.shape, "lam must have enc_hat's shape"
    assert enc_hat.ndim >= 3, "need at least (C, H, W) trailing dims"

    ne = enc_hat.shape[-1] * enc_hat.shape[-2]
    r = delta * lam_init
    coef = float(ne) + r - 1.0
    batch = int(math.prod(enc_hat.shape[:-3])) if enc_hat.ndim > 3 else 1
    inv_b = 1.0 / float(batch)

    total = enc_hat.size
    tail = (-total) % _LANES  # <=127 elements, only to make the reshape legal
    enc_flat = enc_hat.reshape(-1)
    lam_flat = lam.reshape(-1)
    if tail:
        # Minimal pad (only when total % 128 != 0): enc -> 0, lam -> 1; the
        # leftover delta*tail from the fused term is subtracted below.
        enc_flat = jnp.pad(enc_flat, (0, tail))
        lam_flat = jnp.pad(lam_flat, (0, tail), constant_values=1.0)
    rows = (total + tail) // _LANES

    # Lane/sublane-dense layout.
    enc2 = enc_flat.reshape(rows, _LANES)
    lam2 = lam_flat.reshape(rows, _LANES)

    # Adaptive tile sizing: big contiguous blocks for large inputs, tight
    # blocks for small ones (no huge host-side round-up, no wasted DMA).
    target = pl.cdiv(rows, n_parallel)
    if target <= _CHUNK:
        tm = _round_up(target, 16)        # safe sublane packing (f32 & bf16)
        chunk = tm
    else:
        tm = min(_round_up(block_rows, _CHUNK), _round_up(target, _CHUNK))
        chunk = _CHUNK

    blocks_total = pl.cdiv(rows, tm)
    n_par = min(n_parallel, blocks_total)
    steps = pl.cdiv(blocks_total, n_par)
    last_block = blocks_total - 1

    # Clamp so no block DMA ever starts out of bounds; clamped duplicate slots
    # are fully masked in the kernel (their nominal rows are all >= rows).
    def in_map(pidx, jidx):
        return (jnp.minimum(pidx * steps + jidx, last_block), 0)

    kernel = functools.partial(_lambda_loss_kernel, rows=rows, tm=tm,
                               chunk=chunk, inv_b=inv_b, delta=delta, coef=coef)

    partials = pl.pallas_call(
        kernel,
        out_shape=jax.ShapeDtypeStruct((n_par, 8, _LANES), jnp.float32),
        grid_spec=pltpu.PrefetchScalarGridSpec(
            num_scalar_prefetch=0,
            grid=(n_par, steps),  # parallel slices x sequential reduction
            in_specs=[
                pl.BlockSpec((tm, _LANES), in_map),
                pl.BlockSpec((tm, _LANES), in_map),
            ],
            out_specs=pl.BlockSpec((1, 8, _LANES), lambda pidx, jidx: (pidx, 0, 0)),
        ),
        compiler_params=pltpu.CompilerParams(
            dimension_semantics=("parallel", "arbitrary"),
            vmem_limit_bytes=48 * 1024 * 1024,
        ),
    )(enc2, lam2)

    # Tiny final reduction + static pad correction in plain JAX.
    return jnp.sum(partials) - float(tail) * delta


def lambda_loss_2d_ref(enc_hat, lam, hyp):
    """Pure-JAX reference mirroring the PyTorch forward."""
    delta = float(hyp["delta"])
    lam_init = float(hyp["lam"])
    r = delta * lam_init
    ne = enc_hat.shape[-1] * enc_hat.shape[-2]
    lam_enc_l1 = jnp.mean(jnp.sum(jnp.abs(lam * enc_hat), axis=(-1, -2, -3)))
    return lam_enc_l1 + jnp.sum(lam * delta) - (ne + r - 1.0) * jnp.sum(jnp.log(lam))


if __name__ == "__main__":
    key = jax.random.PRNGKey(0)
    k_enc, k_lam = jax.random.split(key)

    B, C, H, W = 2, 4, 16, 16
    enc_hat = jax.random.normal(k_enc, (B, C, H, W), dtype=jnp.float32)
    # lam must be strictly positive (its log is taken), same shape as enc_hat.
    lam = jax.random.uniform(k_lam, (B, C, H, W), dtype=jnp.float32,
                             minval=0.5, maxval=1.5)

    hyp = {"num_conv": 3, "delta": 0.01, "lam": 1.0}

    loss = jax.block_until_ready(lambda_loss_2d(enc_hat, lam, hyp))
    ref = jax.block_until_ready(lambda_loss_2d_ref(enc_hat, lam, hyp))
    assert jnp.allclose(loss, ref, rtol=1e-5, atol=1e-2), (loss, ref)

    print("KERNEL_OK")
</pallas_src>

<mosaic_0001>
module attributes {stable_mosaic.version = 11 : i64} {
  func.func @_lambda_loss_kernel(%arg0: i32, %arg1: i32, %arg2: memref<16x128xf32, #tpu.memory_space<vmem>>, %arg3: memref<16x128xf32, #tpu.memory_space<vmem>>, %arg4: memref<1x8x128xf32, #tpu.memory_space<vmem>>) attributes {dimension_semantics = [#tpu.dimension_semantics<parallel>, #tpu.dimension_semantics<arbitrary>], iteration_bounds = array<i64: 1, 1>, scalar_prefetch = 0 : i64, scratch_operands = 0 : i64, tpu.core_type = #tpu.core_type<tc>, window_params = [{transform_indices = @transform_0, window_bounds = array<i64: 16, 128>}, {transform_indices = @transform_1, window_bounds = array<i64: 16, 128>}, {transform_indices = @transform_2, window_bounds = array<i64: 1, 8, 128>}]} {
    %c1_i32 = arith.constant 1 : i32
    %0 = arith.muli %arg0, %c1_i32 : i32
    %1 = arith.addi %0, %arg1 : i32
    %c16_i32 = arith.constant 16 : i32
    %2 = arith.muli %1, %c16_i32 : i32
    %c0_i32 = arith.constant 0 : i32
    %3 = arith.cmpi eq, %arg1, %c0_i32 : i32
    %4 = arith.extui %3 : i1 to i32
    %c0_i32_0 = arith.constant 0 : i32
    %5 = arith.cmpi ne, %4, %c0_i32_0 : i32
    scf.if %5 {
      %cst = arith.constant 0.000000e+00 : f32
      %14 = vector.broadcast %cst : f32 to vector<1x8x128xf32>
      %c0 = arith.constant 0 : index
      %c0_7 = arith.constant 0 : index
      %c0_8 = arith.constant 0 : index
      %15 = vector.load %arg4[%c0, %c0_7, %c0_8] : memref<1x8x128xf32, #tpu.memory_space<vmem>>, vector<1x8x128xf32>
      tpu.vector_store %arg4[%c0, %c0_7, %c0_8], %14 {strides = array<i32>} : memref<1x8x128xf32, #tpu.memory_space<vmem>>, vector<1x8x128xf32>,
    } else {
    }
    %c16_i32_1 = arith.constant 16 : i32
    %6 = arith.addi %2, %c16_i32_1 : i32
    %c16_i32_2 = arith.constant 16 : i32
    %7 = arith.cmpi sle, %6, %c16_i32_2 : i32
    %c16_i32_3 = arith.constant 16 : i32
    %8 = arith.addi %2, %c16_i32_3 : i32
    %c16_i32_4 = arith.constant 16 : i32
    %9 = arith.cmpi sgt, %8, %c16_i32_4 : i32
    %10 = arith.extui %7 : i1 to i32
    %c0_i32_5 = arith.constant 0 : i32
    %11 = arith.cmpi ne, %10, %c0_i32_5 : i32
    scf.if %11 {
      %c0 = arith.constant 0 : index
      %c0_7 = arith.constant 0 : index
      %c0_8 = arith.constant 0 : index
      %14 = vector.load %arg4[%c0, %c0_7, %c0_8] : memref<1x8x128xf32, #tpu.memory_space<vmem>>, vector<1x8x128xf32>
      %15 = vector.shape_cast %14 : vector<1x8x128xf32> to vector<8x128xf32>
      %c0_9 = arith.constant 0 : index
      %c0_10 = arith.constant 0 : index
      %16 = vector.load %arg2[%c0_9, %c0_10] : memref<16x128xf32, #tpu.memory_space<vmem>>, vector<16x128xf32>
      %c0_11 = arith.constant 0 : index
      %c0_12 = arith.constant 0 : index
      %17 = vector.load %arg3[%c0_11, %c0_12] : memref<16x128xf32, #tpu.memory_space<vmem>>, vector<16x128xf32>
      %18 = math.absf %16 : vector<16x128xf32>
      %cst = arith.constant 5.000000e-01 : f32
      %19 = vector.broadcast %cst : f32 to vector<16x128xf32>
      %20 = arith.mulf %19, %18 : vector<16x128xf32>
      %cst_13 = arith.constant 0.00999999977 : f32
      %21 = vector.broadcast %cst_13 : f32 to vector<16x128xf32>
      %22 = arith.addf %20, %21 : vector<16x128xf32>
      %23 = arith.mulf %17, %22 : vector<16x128xf32>
      %24 = math.log %17 : vector<16x128xf32>
      %cst_14 = arith.constant 2.550100e+02 : f32
      %25 = vector.broadcast %cst_14 : f32 to vector<16x128xf32>
      %26 = arith.mulf %25, %24 : vector<16x128xf32>
      %27 = arith.subf %23, %26 : vector<16x128xf32>
      %28 = vector.shape_cast %27 : vector<16x128xf32> to vector<2x8x128xf32>
      %cst_15 = arith.constant dense<0.000000e+00> : vector<8x128xf32>
      %29 = vector.multi_reduction <add>, %28, %cst_15 [0] : vector<2x8x128xf32> to vector<8x128xf32>
      %30 = arith.addf %15, %29 : vector<8x128xf32>
      %c0_16 = arith.constant 0 : index
      %c0_17 = arith.constant 0 : index
      %c0_18 = arith.constant 0 : index
      %31 = vector.load %arg4[%c0_16, %c0_17, %c0_18] : memref<1x8x128xf32, #tpu.memory_space<vmem>>, vector<1x8x128xf32>
      %32 = vector.shape_cast %31 : vector<1x8x128xf32> to vector<8x128xf32>
      %33 = vector.shape_cast %30 : vector<8x128xf32> to vector<1x8x128xf32>
      tpu.vector_store %arg4[%c0_16, %c0_17, %c0_18], %33 {strides = array<i32>} : memref<1x8x128xf32, #tpu.memory_space<vmem>>, vector<1x8x128xf32>,
    } else {
    }
    %12 = arith.extui %9 : i1 to i32
    %c0_i32_6 = arith.constant 0 : i32
    %13 = arith.cmpi ne, %12, %c0_i32_6 : i32
    scf.if %13 {
      %c0 = arith.constant 0 : index
      %c0_7 = arith.constant 0 : index
      %c0_8 = arith.constant 0 : index
      %14 = vector.load %arg4[%c0, %c0_7, %c0_8] : memref<1x8x128xf32, #tpu.memory_space<vmem>>, vector<1x8x128xf32>
      %15 = vector.shape_cast %14 : vector<1x8x128xf32> to vector<8x128xf32>
      %c0_9 = arith.constant 0 : index
      %c0_10 = arith.constant 0 : index
      %16 = vector.load %arg2[%c0_9, %c0_10] : memref<16x128xf32, #tpu.memory_space<vmem>>, vector<16x128xf32>
      %c0_11 = arith.constant 0 : index
      %c0_12 = arith.constant 0 : index
      %17 = vector.load %arg3[%c0_11, %c0_12] : memref<16x128xf32, #tpu.memory_space<vmem>>, vector<16x128xf32>
      %c0_i32_13 = arith.constant 0 : i32
      %18 = arith.addi %2, %c0_i32_13 : i32
      %c16_i32_14 = arith.constant 16 : i32
      %19 = arith.subi %c16_i32_14, %18 : i32
      %20 = tpu.iota {dimensions = array<i32: 0>} : vector<16x128xi32>
      %21 = vector.broadcast %19 : i32 to vector<16x128xi32>
      %22 = arith.cmpi slt, %20, %21 : vector<16x128xi32>
      %cst = arith.constant 0.000000e+00 : f32
      %23 = vector.broadcast %cst : f32 to vector<16x128xf32>
      %24 = arith.select %22, %16, %23 : vector<16x128xi1>, vector<16x128xf32>
      %cst_15 = arith.constant 0.000000e+00 : f32
      %25 = vector.broadcast %cst_15 : f32 to vector<16x128xf32>
      %26 = arith.select %22, %17, %25 : vector<16x128xi1>, vector<16x128xf32>
      %cst_16 = arith.constant 1.000000e+00 : f32
      %27 = vector.broadcast %cst_16 : f32 to vector<16x128xf32>
      %28 = arith.select %22, %17, %27 : vector<16x128xi1>, vector<16x128xf32>
      %29 = math.absf %24 : vector<16x128xf32>
      %cst_17 = arith.constant 5.000000e-01 : f32
      %30 = vector.broadcast %cst_17 : f32 to vector<16x128xf32>
      %31 = arith.mulf %30, %29 : vector<16x128xf32>
      %cst_18 = arith.constant 0.00999999977 : f32
      %32 = vector.broadcast %cst_18 : f32 to vector<16x128xf32>
      %33 = arith.addf %31, %32 : vector<16x128xf32>
      %34 = arith.mulf %26, %33 : vector<16x128xf32>
      %35 = math.log %28 : vector<16x128xf32>
      %cst_19 = arith.constant 2.550100e+02 : f32
      %36 = vector.broadcast %cst_19 : f32 to vector<16x128xf32>
      %37 = arith.mulf %36, %35 : vector<16x128xf32>
      %38 = arith.subf %34, %37 : vector<16x128xf32>
      %39 = vector.shape_cast %38 : vector<16x128xf32> to vector<2x8x128xf32>
      %cst_20 = arith.constant dense<0.000000e+00> : vector<8x128xf32>
      %40 = vector.multi_reduction <add>, %39, %cst_20 [0] : vector<2x8x128xf32> to vector<8x128xf32>
      %41 = arith.addf %15, %40 : vector<8x128xf32>
      %c0_21 = arith.constant 0 : index
      %c0_22 = arith.constant 0 : index
      %c0_23 = arith.constant 0 : index
      %42 = vector.load %arg4[%c0_21, %c0_22, %c0_23] : memref<1x8x128xf32, #tpu.memory_space<vmem>>, vector<1x8x128xf32>
      %43 = vector.shape_cast %42 : vector<1x8x128xf32> to vector<8x128xf32>
      %44 = vector.shape_cast %41 : vector<8x128xf32> to vector<1x8x128xf32>
      tpu.vector_store %arg4[%c0_21, %c0_22, %c0_23], %44 {strides = array<i32>} : memref<1x8x128xf32, #tpu.memory_space<vmem>>, vector<1x8x128xf32>,
    } else {
    }
    return
  }
  func.func @transform_0(%arg0: i32, %arg1: i32) -> (i32, i32) {
    %c1_i32 = arith.constant 1 : i32
    %0 = arith.muli %arg0, %c1_i32 : i32
    %1 = arith.addi %0, %arg1 : i32
    %c0_i32 = arith.constant 0 : i32
    %2 = arith.minsi %1, %c0_i32 : i32
    %c0_i32_0 = arith.constant 0 : i32
    %c0_i32_1 = arith.constant 0 : i32
    return %2, %c0_i32_0 : i32, i32
  }
  func.func @transform_1(%arg0: i32, %arg1: i32) -> (i32, i32) {
    %c1_i32 = arith.constant 1 : i32
    %0 = arith.muli %arg0, %c1_i32 : i32
    %1 = arith.addi %0, %arg1 : i32
    %c0_i32 = arith.constant 0 : i32
    %2 = arith.minsi %1, %c0_i32 : i32
    %c0_i32_0 = arith.constant 0 : i32
    %c0_i32_1 = arith.constant 0 : i32
    return %2, %c0_i32_0 : i32, i32
  }
  func.func @transform_2(%arg0: i32, %arg1: i32) -> (i32, i32, i32) {
    %c0_i32 = arith.constant 0 : i32
    %c0_i32_0 = arith.constant 0 : i32
    %c0_i32_1 = arith.constant 0 : i32
    return %arg0, %c0_i32, %c0_i32_0 : i32, i32, i32
  }
}

</mosaic_0001>

<llo_original>
// kernel: tpu_custom_call.1
$region0: #{tpu_custom_call.1}
  #allocation0 [shape = 'u32[]', space=smem, size = 0x4, offset = 0x4, fixed_abs, tag = 'smem constant byte address 0x4 - core index']
  #allocation1 [shape = 'u32[72,128]{1,0:T(1,128)}', space=vmem, size = 0x9000, scoped, tag = 'internal scratch']
  %s0 = inlined_call_operand.hbm [shape: f32[16,128], index: 0, kind: input, shape index: {}]
  %s1 = inlined_call_operand.hbm [shape: f32[16,128], index: 1, kind: input, shape index: {}]
  %s2 = inlined_call_operand.hbm [shape: f32[1,8,128], index: 2, kind: output, shape index: {}]
  %s3 = sld [smem:[#allocation0]]
  $region38: #{tpu_custom_call.1} parent=0
    _
  %s5 = ssub.s32 1, %s3
  %s6 = scalar_select 0, %s5, %s3
  $region1: #{tpu_custom_call.1} parent=0
    #allocation2 [shape = 'u8[8192]{0}', space=vmem, size = 0x2000, scoped, tag = 'input window, operand 0, single buffered']
    #allocation3 [shape = 's32[1]{0}', space=sflag, size = 0x4, scoped, tag = 'scoped memory for tpu_custom_call.1']
    #allocation4 [shape = 's32[1]{0}', space=sflag, size = 0x4, scoped, tag = 'scoped memory for tpu_custom_call.1']
    #allocation5 [shape = 'u8[8192]{0}', space=vmem, size = 0x2000, scoped, tag = 'input window, operand 1, single buffered']
    #allocation6 [shape = 's32[1]{0}', space=sflag, size = 0x4, scoped, tag = 'scoped memory for tpu_custom_call.1']
    #allocation7 [shape = 'u8[4096]{0}', space=vmem, size = 0x1000, scoped, tag = 'output window, operand 0, single buffered']
    %7 = vsyncpa [#allocation3], 0
    %8 = vsyncpa [#allocation6], 0
    %9 = vsyncpa [#allocation4], 0
    // Predicated region
    $region2: #{tpu_custom_call.1} parent=1 // pred_check
      _
    $region3: #{tpu_custom_call.1} parent=1 // pred_check_branch
      %11 = sbr.rel (0) target = $region5
    $region4: #{tpu_custom_call.1} parent=1 // pred_region
      %s12 = sadd.s32 0, 0
      %p13 = scmp.lt.s32.totalorder %s12, 0
      %s14 = scalar_select %p13, %s12, 0
      %s15 = smul.u32 2, %s14
      %17 = vsyncadd [#allocation3], 0
      %s18 = smul.addr %s15, 8
      %s19 = scalar_lea.hbm %s0, %s18
      %s20 = sshll.u32 %s19, 4
      %s21 = int_to_ptr.hbm [resolvable:$true] %s20
      %s22 = sshll.u32 [#allocation2], 4
      %s23 = int_to_ptr.vmem [resolvable:$true] %s22
      %28 = dma.hbm_to_vmem [thread:$0]  %s21, 256, %s23, [#allocation3], 128, 128, 8
    $region5: #{tpu_custom_call.1} parent=1 // pred_fallthru
      _
    // Predicated region
    $region6: #{tpu_custom_call.1} parent=1 // pred_check
      _
    $region7: #{tpu_custom_call.1} parent=1 // pred_check_branch
      %30 = sbr.rel (0) target = $region9
    $region8: #{tpu_custom_call.1} parent=1 // pred_region
      %s31 = sadd.s32 0, 0
      %p32 = scmp.lt.s32.totalorder %s31, 0
      %s33 = scalar_select %p32, %s31, 0
      %s34 = smul.u32 2, %s33
      %36 = vsyncadd [#allocation6], 0
      %s37 = smul.addr %s34, 8
      %s38 = scalar_lea.hbm %s1, %s37
      %s39 = sshll.u32 %s38, 4
      %s40 = int_to_ptr.hbm [resolvable:$true] %s39
      %s41 = sshll.u32 [#allocation5], 4
      %s42 = int_to_ptr.vmem [resolvable:$true] %s41
      %47 = dma.hbm_to_vmem [thread:$0]  %s40, 256, %s42, [#allocation6], 128, 128, 8
    $region9: #{tpu_custom_call.1} parent=1 // pred_fallthru
      _
    // Predicated region
    $region10: #{tpu_custom_call.1} parent=1 // pred_check
      _
    $region11: #{tpu_custom_call.1} parent=1 // pred_check_branch
      %49 = sbr.rel (0) target = $region13
    $region12: #{tpu_custom_call.1} parent=1 // pred_region
      %51 = dma.done [#allocation3], 256
    $region13: #{tpu_custom_call.1} parent=1 // pred_fallthru
      _
    // Predicated region
    $region14: #{tpu_custom_call.1} parent=1 // pred_check
      _
    $region15: #{tpu_custom_call.1} parent=1 // pred_check_branch
      %53 = sbr.rel (0) target = $region17
    $region16: #{tpu_custom_call.1} parent=1 // pred_region
      %55 = dma.done [#allocation6], 256
    $region17: #{tpu_custom_call.1} parent=1 // pred_fallthru
      _
    %s56 = sadd.s32 0, 0
    %p57 = scmp.lt.s32.totalorder %s56, 0
    %s58 = scalar_select %p57, %s56, 0
    %s59 = smul.u32 2, %s58
    %s60 = sadd.s32 0, 0
    %p61 = scmp.lt.s32.totalorder %s60, 0
    %s62 = scalar_select %p61, %s60, 0
    %s63 = smul.u32 2, %s62
    %s64 = sadd.s32 0, 0
    %s65 = smul.u32 %s64, 16
    %p66 = scmp.eq.s32.totalorder 0, 0
    // Predicated region
    $region18: #{tpu_custom_call.1} parent=1 // pred_check
      %p67 = pneg %p66
    $region19: #{tpu_custom_call.1} parent=1 // pred_check_branch
      %69 = sbr.rel (%p67) target = $region21
    $region20: #{tpu_custom_call.1} parent=1 // pred_region
      %70 = vst [vmem:[#allocation7] sm:$0xff] 0.0
    $region21: #{tpu_custom_call.1} parent=1 // pred_fallthru
      _
    %s71 = sadd.s32 %s65, 16
    %p72 = scmp.le.s32.totalorder %s71, 16
    %p73 = scmp.gt.s32.totalorder %s71, 16
    // Predicated region
    $region22: #{tpu_custom_call.1} parent=1 // pred_check
      %p74 = pneg %p72
    $region23: #{tpu_custom_call.1} parent=1 // pred_check_branch
      %76 = sbr.rel (%p74) target = $region25
    $region24: #{tpu_custom_call.1} parent=1 // pred_region
      %v77 = vld [vmem:[#allocation7] sm:$0xff]
      %v78 = vld [vmem:[#allocation2] sm:$0xff]
      %v79 = vld [vmem:[#allocation2 + $0x8] sm:$0xff]
      %v80 = vld [vmem:[#allocation5] sm:$0xff]
      %v81 = vld [vmem:[#allocation5 + $0x8] sm:$0xff]
      %v82 = vand.u32 2147483647, %v78
      %v83 = vand.u32 2147483647, %v79
      %v84 = vmul.f32 %v82, 0.5
      %v85 = vmul.f32 %v83, 0.5
      %v86 = vadd.f32 %v84, 0.01
      %v87 = vadd.f32 %v85, 0.01
      %v88 = vmul.f32 %v80, %v86
      %v89 = vmul.f32 %v81, %v87
      %v90 = vlog2.pop %v80
      %v91 = vmul.f32 %v90, 0.6931472
      %v92 = vlog2.pop %v81
      %v93 = vmul.f32 %v92, 0.6931472
      %v94 = vmul.f32 %v91, 255.01
      %v95 = vmul.f32 %v93, 255.01
      %v96 = vsub.f32 %v88, %v94
      %v97 = vsub.f32 %v89, %v95
      %v98 = vadd.f32 %v96, %v97
      %v99 = vadd.f32 %v77, %v98
      %100 = vst [vmem:[#allocation7] sm:$0xff] %v99
    $region25: #{tpu_custom_call.1} parent=1 // pred_fallthru
      _
    // Predicated region
    $region26: #{tpu_custom_call.1} parent=1 // pred_check
      %p101 = pneg %p73
    $region27: #{tpu_custom_call.1} parent=1 // pred_check_branch
      %103 = sbr.rel (%p101) target = $region29
    $region28: #{tpu_custom_call.1} parent=1 // pred_region
      %v104 = vld [vmem:[#allocation7] sm:$0xff]
      %v105 = vld [vmem:[#allocation2] sm:$0xff]
      %v106 = vld [vmem:[#allocation2 + $0x8] sm:$0xff]
      %v107 = vld [vmem:[#allocation5] sm:$0xff]
      %v108 = vld [vmem:[#allocation5 + $0x8] sm:$0xff]
      %s109 = ssub.s32 16, %s65
      %v110 = vlaneseq
      %v111 = vshrl.u32 %v110, 7
      %v112 = vadd.s32 %v111, 8
      %v113 = vstv %s109
      %vm114 = vcmp.lt.s32.totalorder %v111, %v113
      %vm115 = vcmp.lt.s32.totalorder %v112, %v113
      %v116 = vsel %vm114, %v105, 0.0
      %v117 = vsel %vm115, %v106, 0.0
      %v118 = vsel %vm114, %v107, 0.0
      %v119 = vsel %vm115, %v108, 0.0
      %v120 = vsel %vm114, %v107, 1.0
      %v121 = vsel %vm115, %v108, 1.0
      %v122 = vand.u32 2147483647, %v116
      %v123 = vand.u32 2147483647, %v117
      %v124 = vmul.f32 %v122, 0.5
      %v125 = vmul.f32 %v123, 0.5
      %v126 = vadd.f32 %v124, 0.01
      %v127 = vadd.f32 %v125, 0.01
      %v128 = vmul.f32 %v118, %v126
      %v129 = vmul.f32 %v119, %v127
      %v130 = vlog2.pop %v120
      %v131 = vmul.f32 %v130, 0.6931472
      %v132 = vlog2.pop %v121
      %v133 = vmul.f32 %v132, 0.6931472
      %v134 = vmul.f32 %v131, 255.01
      %v135 = vmul.f32 %v133, 255.01
      %v136 = vsub.f32 %v128, %v134
      %v137 = vsub.f32 %v129, %v135
      %v138 = vadd.f32 %v136, %v137
      %v139 = vadd.f32 %v104, %v138
      %140 = vst [vmem:[#allocation7] sm:$0xff] %v139
    $region29: #{tpu_custom_call.1} parent=1 // pred_fallthru
      _
    // Predicated region
    $region30: #{tpu_custom_call.1} parent=1 // pred_check
      _
    $region31: #{tpu_custom_call.1} parent=1 // pred_check_branch
      %142 = sbr.rel (0) target = $region33
    $region32: #{tpu_custom_call.1} parent=1 // pred_region
      %144 = vsyncadd [#allocation4], 0
      %s146 = sshll.u32 [#allocation7], 4
      %s147 = int_to_ptr.vmem [resolvable:$true] %s146
      %s148 = sshll.u32 %s2, 4
      %s149 = int_to_ptr.hbm [resolvable:$true] %s148
      %151 = dma.vmem_to_hbm [thread:$0]  %s147, 128, %s149, [#allocation4]
    $region33: #{tpu_custom_call.1} parent=1 // pred_fallthru
      _
    // Predicated region
    $region34: #{tpu_custom_call.1} parent=1 // pred_check
      _
    $region35: #{tpu_custom_call.1} parent=1 // pred_check_branch
      %153 = sbr.rel (0) target = $region37
    $region36: #{tpu_custom_call.1} parent=1 // pred_region
      %155 = dma.done [#allocation4], 128
    $region37: #{tpu_custom_call.1} parent=1 // pred_fallthru
      _
    %156 = vsyncpa [#allocation3], 1
    %157 = vsyncpa [#allocation6], 1
    %158 = vsyncpa [#allocation4], 1

</llo_original>
